<compile_context>
chip_gen: v5e
topology: v5e:2x2
jax: 0.10.0
libtpu: 0.0.40
codegen_flags: <defaults>
</compile_context>

<pallas_src>
import jax
import jax.numpy as jnp
from jax.experimental import pallas as pl
from jax.experimental.pallas import tpu as pltpu


def _pos_enc_dma_kernel(table_hbm, out_hbm, sem):
    # table_hbm: (n, d_model) embedding table, left in HBM (pl.ANY)
    # out_hbm:   (L, d_model) output buffer, left in HBM (pl.ANY)
    # sem:       DMA completion semaphore
    L = out_hbm.shape[0]
    copy = pltpu.make_async_copy(
        table_hbm.at[pl.ds(0, L), :],  # contiguous first-L-rows slice
        out_hbm,
        sem,
    )
    copy.start()
    copy.wait()


def learnable_positional_encoding(x, table):
    """JAX/Pallas equivalent of LearnablePositionalEncoding.forward.

    x:     (batch, seq, ...)   -- only x.shape[1] (seq length) is used
    table: (n_positions, d_model) embedding weight
    returns (seq, d_model), dtype of `table`
    """
    L = x.shape[1]
    n, d_model = table.shape
    assert L <= n, "sequence length exceeds number of learned positions"

    # Highest-value optimization: when the slice is the whole table there is
    # nothing to copy at all.
    if L == n:
        return table

    # General case: one HBM->HBM DMA, no grid, no VMEM staging.
    return pl.pallas_call(
        _pos_enc_dma_kernel,
        out_shape=jax.ShapeDtypeStruct((L, d_model), table.dtype),
        in_specs=[pl.BlockSpec(memory_space=pl.ANY)],
        out_specs=pl.BlockSpec(memory_space=pl.ANY),
        scratch_shapes=[pltpu.SemaphoreType.DMA],
    )(table)


if __name__ == "__main__":
    key = jax.random.PRNGKey(0)
    k_table, k_x = jax.random.split(key)

    # module config: n learned positions, d_model hidden size
    n_positions = 16
    d_model = 128
    batch = 2
    seq = 8

    # deterministic "learned" parameters (nn.Embedding init ~ N(0, 1))
    table = jax.random.normal(k_table, (n_positions, d_model), dtype=jnp.float32)

    # example input: only the sequence length (axis 1) matters
    x = jax.random.normal(k_x, (batch, seq, d_model), dtype=jnp.float32)

    # Kernel path (L < n): single HBM->HBM DMA.
    out = learnable_positional_encoding(x, table)
    out = jax.block_until_ready(out)

    ref = table[:seq]
    assert out.shape == (seq, d_model)
    assert out.dtype == jnp.float32
    assert jnp.array_equal(out, ref), "mismatch vs reference slice"

    # Short-circuit path (L == n): returns the table itself.
    x_full = jnp.zeros((batch, n_positions, d_model), dtype=jnp.float32)
    out_full = jax.block_until_ready(learnable_positional_encoding(x_full, table))
    assert jnp.array_equal(out_full, table)

    print("KERNEL_OK")
</pallas_src>

<mosaic_0001>
module attributes {stable_mosaic.version = 11 : i64} {
  func.func @_pos_enc_dma_kernel(%arg0: memref<16x128xf32, #tpu.memory_space<any>>, %arg1: memref<8x128xf32, #tpu.memory_space<any>>, %arg2: memref<!tpu.dma_semaphore, #tpu.memory_space<semaphore_mem>>) attributes {dimension_semantics = [], scalar_prefetch = 0 : i64, scratch_operands = 1 : i64, tpu.core_type = #tpu.core_type<tc>} {
    %c0_i32 = arith.constant 0 : i32
    %c0_i32_0 = arith.constant 0 : i32
    %0 = tpu.memref_slice %arg0[%c0_i32, %c0_i32_0] : memref<16x128xf32, #tpu.memory_space<any>> -> memref<8x128xf32, #tpu.memory_space<any>>
    tpu.enqueue_dma source(%0 : memref<8x128xf32, #tpu.memory_space<any>>) target(%arg1 : memref<8x128xf32, #tpu.memory_space<any>>) target_semaphore(%arg2 : memref<!tpu.dma_semaphore, #tpu.memory_space<semaphore_mem>>)
    %c0_i32_1 = arith.constant 0 : i32
    %c0_i32_2 = arith.constant 0 : i32
    %1 = tpu.memref_slice %arg0[%c0_i32_1, %c0_i32_2] : memref<16x128xf32, #tpu.memory_space<any>> -> memref<8x128xf32, #tpu.memory_space<any>>
    tpu.wait_dma2 semaphore(%arg2 : memref<!tpu.dma_semaphore, #tpu.memory_space<semaphore_mem>>) src(%1 : memref<8x128xf32, #tpu.memory_space<any>>) dst(%arg1 : memref<8x128xf32, #tpu.memory_space<any>>)
    return
  }
}

</mosaic_0001>

<llo_original>
// kernel: tpu_custom_call.1
$region0: #{tpu_custom_call.1}
  #allocation0 [shape = 'u32[]', space=smem, size = 0x4, offset = 0x4, fixed_abs, tag = 'smem constant byte address 0x4 - core index']
  #allocation1 [shape = 'u32[72,128]{1,0:T(1,128)}', space=vmem, size = 0x9000, scoped, tag = 'internal scratch']
  #allocation2 [shape = 's32[1]{0}', space=sflag, size = 0x4, scoped, tag = 'scratch operand']
  #allocation3 [shape = 's32[]', space=sflag, size = 0x4, offset = 0, fixed_abs, tag = 'sflag constant byte address 0x0 - dummy sync flag']
  #allocation4 [shape = 'u32[0]{0}', space=smem, size = 0, offset = 0, fixed_abs, tag = 'smem constant byte address 0x0 - null']
  %s0 = inlined_call_operand.hbm [shape: f32[16,128], index: 0, kind: input, shape index: {}]
  %s1 = inlined_call_operand.hbm [shape: f32[8,128], index: 1, kind: output, shape index: {}]
  %s2 = sld [smem:[#allocation0]]
  $region2: #{tpu_custom_call.1} parent=0
    _
  %s4 = ssub.s32 1, %s2
  %s5 = scalar_select 0, %s4, %s2
  %s7 = sshll.u32 1, 14
  %s8 = sxor.u32 4294967295, %s7
  %s10 = sshll.u32 %s0, 4
  %s11 = int_to_ptr.hbm [resolvable:$true] %s10
  %s12 = sshll.u32 %s1, 4
  %s13 = int_to_ptr.hbm [resolvable:$true] %s12
  %16 = dma.general %s11, 128, %s13, [#allocation2], [#allocation3], [#allocation4], 0, 0
  %s17 = smul.u32 8, 1
  %s18 = sshll.u32 %s17, 4
  %19 = dma.done [#allocation2], %s18
  %20 = vsyncmov [#allocation2]
  %s21 = vpop.sfrf %20
  %p22 = scmp.eq.s32.totalorder %s21, 0
  %p23 = pneg %p22
  %25 = shalt.err (%p23)

</llo_original>
